<compile_context>
chip_gen: v5e
topology: v5e:2x2
jax: 0.10.0
libtpu: 0.0.40
codegen_flags: <defaults>
</compile_context>

<pallas_src>
import functools

import jax
import jax.numpy as jnp
from jax.experimental import pallas as pl
from jax.experimental.pallas import tpu as pltpu

LANES = 128
DEFAULT_TILE_BYTES = 4 * 1024 * 1024  # ~4 MiB per input per grid step


def _round_up(x, m):
    return ((x + m - 1) // m) * m


def _rmsf_sse_kernel(pred_ref, true_ref, out_ref, *,
                     row_tile, rows, steps_per_core, acc_rows, needs_mask):
    """Accumulates per-(sublane, lane) partial sums of (pred-true)^2 into the
    resident output block owned by this core."""
    c = pl.program_id(0)          # core/parallel axis
    i = pl.program_id(1)          # reduction axis (resident output block)

    @pl.when(i == 0)
    def _init():
        out_ref[...] = jnp.zeros_like(out_ref)

    diff = pred_ref[...].astype(jnp.float32) - true_ref[...].astype(jnp.float32)
    sq = diff * diff

    if needs_mask:
        # Zero rows that are logically past the end of the (rows, 128) array:
        # the ragged tail of the last block and any duplicated clamped block
        # assigned to the second core.  Garbage in the out-of-bounds region is
        # select-ed away (not multiplied), so NaNs cannot leak through.
        row0 = (c * steps_per_core + i) * row_tile
        limit = rows - row0                                    # traced scalar
        local = jax.lax.broadcasted_iota(jnp.int32, sq.shape, 0)
        sq = jnp.where(local < limit, sq, 0.0)

    if acc_rows == 8:
        # Pure VALU vreg adds: fold (row_tile, 128) -> (row_tile//8, 8, 128)
        # and reduce the leading (major) axis into the (8, 128) accumulator.
        out_ref[...] += sq.reshape(row_tile // 8, 8, sq.shape[-1]).sum(axis=0)
    else:
        # Tiny-input fallback (fewer than one sublane group of rows).
        out_ref[...] += jnp.sum(sq, axis=0, keepdims=True)


def rmsf_loss(y_pred, y_true, *, mse_weight=0.7, rmse_weight=0.3, eps=1e-8,
              tile_bytes=DEFAULT_TILE_BYTES):
    assert y_pred.shape == y_true.shape, "y_pred / y_true shape mismatch"
    n_elems = int(y_pred.size)
    if n_elems == 0:
        raise ValueError("RMSFLoss requires non-empty inputs")

    itemsize = jnp.dtype(y_pred.dtype).itemsize

    p = jnp.ravel(y_pred)
    t = jnp.ravel(y_true)

    # Pad ONLY to the 128-lane multiple.  Identical zero padding in pred and
    # true contributes exactly 0 to the SSE; the 128-aligned case is a free
    # reshape (no copy).
    n_padded = _round_up(n_elems, LANES)
    if n_padded != n_elems:
        p = jnp.pad(p, (0, n_padded - n_elems))
        t = jnp.pad(t, (0, n_padded - n_elems))
    rows = n_padded // LANES
    p2 = p.reshape(rows, LANES)
    t2 = t.reshape(rows, LANES)

    # Byte-sized, dtype-aware row tile (~tile_bytes per input per grid step).
    sub = 8 * max(1, 4 // itemsize)                 # f32: 8, bf16: 16, int8: 32
    row_tile_target = max(sub, (tile_bytes // (LANES * itemsize)) // sub * sub)
    if rows >= sub:
        row_tile = min(row_tile_target, (rows // sub) * sub)
    else:
        row_tile = rows                              # block == full (tiny) array
    acc_rows = 8 if row_tile % 8 == 0 else 1

    num_blocks = pl.cdiv(rows, row_tile)
    # v7x has 2 TensorCores; on single-core chips the extra "parallel" grid
    # point is just one more serial (fully masked or real) iteration.
    n_cores = 2 if num_blocks > 1 else 1
    steps = pl.cdiv(num_blocks, n_cores)
    needs_mask = (rows % row_tile != 0) or (n_cores * steps != num_blocks)

    def in_map(c, i):
        # Clamp so the DMA never walks past the array; duplicated (clamped)
        # blocks are fully masked inside the kernel via the logical index.
        return (jnp.minimum(c * steps + i, num_blocks - 1), 0)

    block_bytes = row_tile * LANES * itemsize
    # 2 inputs x 2 pipeline buffers + headroom; keep under v7x's 64 MiB VMEM.
    vmem_limit = int(min(48 * 1024 * 1024,
                         max(32 * 1024 * 1024, 4 * block_bytes + (2 << 20))))

    kernel = functools.partial(
        _rmsf_sse_kernel,
        row_tile=row_tile, rows=rows, steps_per_core=steps,
        acc_rows=acc_rows, needs_mask=needs_mask)

    partial = pl.pallas_call(
        kernel,
        out_shape=jax.ShapeDtypeStruct((n_cores * acc_rows, LANES), jnp.float32),
        grid_spec=pltpu.PrefetchScalarGridSpec(
            num_scalar_prefetch=0,
            grid=(n_cores, steps),
            in_specs=[
                pl.BlockSpec((row_tile, LANES), in_map),
                pl.BlockSpec((row_tile, LANES), in_map),
            ],
            # Each core owns one resident accumulator block across the whole
            # (reduction) grid axis.
            out_specs=pl.BlockSpec((acc_rows, LANES), lambda c, i: (c, 0)),
        ),
        compiler_params=pltpu.CompilerParams(
            dimension_semantics=("parallel", "arbitrary"),
            vmem_limit_bytes=vmem_limit,
        ),
        cost_estimate=pl.CostEstimate(
            flops=3 * n_elems,
            transcendentals=0,
            bytes_accessed=2 * n_elems * itemsize,
        ),
    )(p2, t2)

    # Tiny epilogue (one cross-lane reduce + sqrt + weighted combine) done as
    # plain XLA ops on the (n_cores*8, 128) partial sums.
    sse = jnp.sum(partial)
    mse = sse / jnp.float32(n_elems)
    rmse = jnp.sqrt(mse + jnp.float32(eps))
    return jnp.float32(mse_weight) * mse + jnp.float32(rmse_weight) * rmse


def rmsf_loss_ref(y_pred, y_true, mse_weight=0.7, rmse_weight=0.3, eps=1e-8):
    mse = jnp.mean((y_pred.astype(jnp.float32) - y_true.astype(jnp.float32)) ** 2)
    rmse = jnp.sqrt(mse + eps)
    return mse_weight * mse + rmse_weight * rmse


if __name__ == "__main__":
    key = jax.random.PRNGKey(0)
    k1, k2, k3, k4 = jax.random.split(key, 4)

    # Typical RMSF-prediction-like shape: (batch, channels, H, W)
    shape = (2, 4, 16, 16)
    y_pred = jax.random.normal(k1, shape, dtype=jnp.float32)
    y_true = jax.random.normal(k2, shape, dtype=jnp.float32)
    loss = jax.block_until_ready(rmsf_loss(y_pred, y_true))
    ref = rmsf_loss_ref(y_pred, y_true)
    assert jnp.allclose(loss, ref, rtol=1e-5, atol=1e-6), (loss, ref)

    # Unaligned / multi-block / 2-way-split path: a tiny tile_bytes is used so
    # the ragged-tail masking and the parallel core axis are exercised at a
    # small input size.
    shape2 = (2, 4, 50, 37)
    yp2 = jax.random.normal(k3, shape2, dtype=jnp.float32)
    yt2 = jax.random.normal(k4, shape2, dtype=jnp.float32)
    loss2 = jax.block_until_ready(rmsf_loss(yp2, yt2, tile_bytes=16 * 1024))
    ref2 = rmsf_loss_ref(yp2, yt2)
    assert jnp.allclose(loss2, ref2, rtol=1e-5, atol=1e-6), (loss2, ref2)

    print("KERNEL_OK")
</pallas_src>

<mosaic_0001>
module attributes {stable_mosaic.version = 11 : i64} {
  func.func @_rmsf_sse_kernel(%arg0: i32, %arg1: i32, %arg2: memref<16x128xf32, #tpu.memory_space<vmem>>, %arg3: memref<16x128xf32, #tpu.memory_space<vmem>>, %arg4: memref<8x128xf32, #tpu.memory_space<vmem>>) attributes {dimension_semantics = [#tpu.dimension_semantics<parallel>, #tpu.dimension_semantics<arbitrary>], iteration_bounds = array<i64: 1, 1>, scalar_prefetch = 0 : i64, scratch_operands = 0 : i64, tpu.core_type = #tpu.core_type<tc>, window_params = [{transform_indices = @transform_0, window_bounds = array<i64: 16, 128>}, {transform_indices = @transform_1, window_bounds = array<i64: 16, 128>}, {transform_indices = @transform_2, window_bounds = array<i64: 8, 128>}]} {
    %c0_i32 = arith.constant 0 : i32
    %0 = arith.cmpi eq, %arg1, %c0_i32 : i32
    %1 = arith.extui %0 : i1 to i32
    %c0_i32_0 = arith.constant 0 : i32
    %2 = arith.cmpi ne, %1, %c0_i32_0 : i32
    scf.if %2 {
      %cst_8 = arith.constant 0.000000e+00 : f32
      %12 = vector.broadcast %cst_8 : f32 to vector<8x128xf32>
      %c0_9 = arith.constant 0 : index
      %c0_10 = arith.constant 0 : index
      %13 = vector.load %arg4[%c0_9, %c0_10] : memref<8x128xf32, #tpu.memory_space<vmem>>, vector<8x128xf32>
      tpu.vector_store %arg4[%c0_9, %c0_10], %12 {strides = array<i32>} : memref<8x128xf32, #tpu.memory_space<vmem>>, vector<8x128xf32>,
    } else {
    }
    %c0 = arith.constant 0 : index
    %c0_1 = arith.constant 0 : index
    %3 = vector.load %arg2[%c0, %c0_1] : memref<16x128xf32, #tpu.memory_space<vmem>>, vector<16x128xf32>
    %c0_2 = arith.constant 0 : index
    %c0_3 = arith.constant 0 : index
    %4 = vector.load %arg3[%c0_2, %c0_3] : memref<16x128xf32, #tpu.memory_space<vmem>>, vector<16x128xf32>
    %5 = arith.subf %3, %4 : vector<16x128xf32>
    %6 = arith.mulf %5, %5 : vector<16x128xf32>
    %c0_4 = arith.constant 0 : index
    %c0_5 = arith.constant 0 : index
    %7 = vector.load %arg4[%c0_4, %c0_5] : memref<8x128xf32, #tpu.memory_space<vmem>>, vector<8x128xf32>
    %8 = vector.shape_cast %6 : vector<16x128xf32> to vector<2x8x128xf32>
    %cst = arith.constant dense<0.000000e+00> : vector<8x128xf32>
    %9 = vector.multi_reduction <add>, %8, %cst [0] : vector<2x8x128xf32> to vector<8x128xf32>
    %10 = arith.addf %7, %9 : vector<8x128xf32>
    %c0_6 = arith.constant 0 : index
    %c0_7 = arith.constant 0 : index
    %11 = vector.load %arg4[%c0_6, %c0_7] : memref<8x128xf32, #tpu.memory_space<vmem>>, vector<8x128xf32>
    tpu.vector_store %arg4[%c0_6, %c0_7], %10 {strides = array<i32>} : memref<8x128xf32, #tpu.memory_space<vmem>>, vector<8x128xf32>,
    return
  }
  func.func @transform_0(%arg0: i32, %arg1: i32) -> (i32, i32) {
    %c1_i32 = arith.constant 1 : i32
    %0 = arith.muli %arg0, %c1_i32 : i32
    %1 = arith.addi %0, %arg1 : i32
    %c0_i32 = arith.constant 0 : i32
    %2 = arith.minsi %1, %c0_i32 : i32
    %c0_i32_0 = arith.constant 0 : i32
    %c0_i32_1 = arith.constant 0 : i32
    return %2, %c0_i32_0 : i32, i32
  }
  func.func @transform_1(%arg0: i32, %arg1: i32) -> (i32, i32) {
    %c1_i32 = arith.constant 1 : i32
    %0 = arith.muli %arg0, %c1_i32 : i32
    %1 = arith.addi %0, %arg1 : i32
    %c0_i32 = arith.constant 0 : i32
    %2 = arith.minsi %1, %c0_i32 : i32
    %c0_i32_0 = arith.constant 0 : i32
    %c0_i32_1 = arith.constant 0 : i32
    return %2, %c0_i32_0 : i32, i32
  }
  func.func @transform_2(%arg0: i32, %arg1: i32) -> (i32, i32) {
    %c0_i32 = arith.constant 0 : i32
    %c0_i32_0 = arith.constant 0 : i32
    return %arg0, %c0_i32 : i32, i32
  }
}

</mosaic_0001>

<llo_original>
// kernel: tpu_custom_call.1
$region0: #{tpu_custom_call.1}
  #allocation0 [shape = 'u32[]', space=smem, size = 0x4, offset = 0x4, fixed_abs, tag = 'smem constant byte address 0x4 - core index']
  #allocation1 [shape = 'u32[72,128]{1,0:T(1,128)}', space=vmem, size = 0x9000, scoped, tag = 'internal scratch']
  %s0 = inlined_call_operand.hbm [shape: f32[16,128], index: 0, kind: input, shape index: {}]
  %s1 = inlined_call_operand.hbm [shape: f32[16,128], index: 1, kind: input, shape index: {}]
  %s2 = inlined_call_operand.hbm [shape: f32[8,128], index: 2, kind: output, shape index: {}]
  %s3 = sld [smem:[#allocation0]]
  $region30: #{tpu_custom_call.1} parent=0
    _
  %s5 = ssub.s32 1, %s3
  %s6 = scalar_select 0, %s5, %s3
  $region1: #{tpu_custom_call.1} parent=0
    #allocation2 [shape = 'u8[8192]{0}', space=vmem, size = 0x2000, scoped, tag = 'input window, operand 0, single buffered']
    #allocation3 [shape = 's32[1]{0}', space=sflag, size = 0x4, scoped, tag = 'scoped memory for tpu_custom_call.1']
    #allocation4 [shape = 's32[1]{0}', space=sflag, size = 0x4, scoped, tag = 'scoped memory for tpu_custom_call.1']
    #allocation5 [shape = 'u8[8192]{0}', space=vmem, size = 0x2000, scoped, tag = 'input window, operand 1, single buffered']
    #allocation6 [shape = 's32[1]{0}', space=sflag, size = 0x4, scoped, tag = 'scoped memory for tpu_custom_call.1']
    #allocation7 [shape = 'u8[4096]{0}', space=vmem, size = 0x1000, scoped, tag = 'output window, operand 0, single buffered']
    %7 = vsyncpa [#allocation3], 0
    %8 = vsyncpa [#allocation6], 0
    %9 = vsyncpa [#allocation4], 0
    // Predicated region
    $region2: #{tpu_custom_call.1} parent=1 // pred_check
      _
    $region3: #{tpu_custom_call.1} parent=1 // pred_check_branch
      %11 = sbr.rel (0) target = $region5
    $region4: #{tpu_custom_call.1} parent=1 // pred_region
      %s12 = sadd.s32 0, 0
      %p13 = scmp.lt.s32.totalorder %s12, 0
      %s14 = scalar_select %p13, %s12, 0
      %s15 = smul.u32 2, %s14
      %17 = vsyncadd [#allocation3], 0
      %s18 = smul.addr %s15, 8
      %s19 = scalar_lea.hbm %s0, %s18
      %s20 = sshll.u32 %s19, 4
      %s21 = int_to_ptr.hbm [resolvable:$true] %s20
      %s22 = sshll.u32 [#allocation2], 4
      %s23 = int_to_ptr.vmem [resolvable:$true] %s22
      %28 = dma.hbm_to_vmem [thread:$0]  %s21, 256, %s23, [#allocation3], 128, 128, 8
    $region5: #{tpu_custom_call.1} parent=1 // pred_fallthru
      _
    // Predicated region
    $region6: #{tpu_custom_call.1} parent=1 // pred_check
      _
    $region7: #{tpu_custom_call.1} parent=1 // pred_check_branch
      %30 = sbr.rel (0) target = $region9
    $region8: #{tpu_custom_call.1} parent=1 // pred_region
      %s31 = sadd.s32 0, 0
      %p32 = scmp.lt.s32.totalorder %s31, 0
      %s33 = scalar_select %p32, %s31, 0
      %s34 = smul.u32 2, %s33
      %36 = vsyncadd [#allocation6], 0
      %s37 = smul.addr %s34, 8
      %s38 = scalar_lea.hbm %s1, %s37
      %s39 = sshll.u32 %s38, 4
      %s40 = int_to_ptr.hbm [resolvable:$true] %s39
      %s41 = sshll.u32 [#allocation5], 4
      %s42 = int_to_ptr.vmem [resolvable:$true] %s41
      %47 = dma.hbm_to_vmem [thread:$0]  %s40, 256, %s42, [#allocation6], 128, 128, 8
    $region9: #{tpu_custom_call.1} parent=1 // pred_fallthru
      _
    // Predicated region
    $region10: #{tpu_custom_call.1} parent=1 // pred_check
      _
    $region11: #{tpu_custom_call.1} parent=1 // pred_check_branch
      %49 = sbr.rel (0) target = $region13
    $region12: #{tpu_custom_call.1} parent=1 // pred_region
      %51 = dma.done [#allocation3], 256
    $region13: #{tpu_custom_call.1} parent=1 // pred_fallthru
      _
    // Predicated region
    $region14: #{tpu_custom_call.1} parent=1 // pred_check
      _
    $region15: #{tpu_custom_call.1} parent=1 // pred_check_branch
      %53 = sbr.rel (0) target = $region17
    $region16: #{tpu_custom_call.1} parent=1 // pred_region
      %55 = dma.done [#allocation6], 256
    $region17: #{tpu_custom_call.1} parent=1 // pred_fallthru
      _
    %s56 = sadd.s32 0, 0
    %p57 = scmp.lt.s32.totalorder %s56, 0
    %s58 = scalar_select %p57, %s56, 0
    %s59 = smul.u32 2, %s58
    %s60 = sadd.s32 0, 0
    %p61 = scmp.lt.s32.totalorder %s60, 0
    %s62 = scalar_select %p61, %s60, 0
    %s63 = smul.u32 2, %s62
    %p64 = scmp.eq.s32.totalorder 0, 0
    // Predicated region
    $region18: #{tpu_custom_call.1} parent=1 // pred_check
      %p65 = pneg %p64
    $region19: #{tpu_custom_call.1} parent=1 // pred_check_branch
      %67 = sbr.rel (%p65) target = $region21
    $region20: #{tpu_custom_call.1} parent=1 // pred_region
      %68 = vst [vmem:[#allocation7] sm:$0xff] 0.0
    $region21: #{tpu_custom_call.1} parent=1 // pred_fallthru
      _
    %v69 = vld [vmem:[#allocation2] sm:$0xff]
    %v70 = vld [vmem:[#allocation2 + $0x8] sm:$0xff]
    %v71 = vld [vmem:[#allocation5] sm:$0xff]
    %v72 = vld [vmem:[#allocation5 + $0x8] sm:$0xff]
    %v73 = vsub.f32 %v69, %v71
    %v74 = vsub.f32 %v70, %v72
    %v75 = vmul.f32 %v73, %v73
    %v76 = vmul.f32 %v74, %v74
    %v77 = vld [vmem:[#allocation7] sm:$0xff]
    %v78 = vadd.f32 %v75, %v76
    %v79 = vadd.f32 %v77, %v78
    %80 = vst [vmem:[#allocation7] sm:$0xff] %v79
    // Predicated region
    $region22: #{tpu_custom_call.1} parent=1 // pred_check
      _
    $region23: #{tpu_custom_call.1} parent=1 // pred_check_branch
      %82 = sbr.rel (0) target = $region25
    $region24: #{tpu_custom_call.1} parent=1 // pred_region
      %84 = vsyncadd [#allocation4], 0
      %s86 = sshll.u32 [#allocation7], 4
      %s87 = int_to_ptr.vmem [resolvable:$true] %s86
      %s88 = sshll.u32 %s2, 4
      %s89 = int_to_ptr.hbm [resolvable:$true] %s88
      %91 = dma.vmem_to_hbm [thread:$0]  %s87, 128, %s89, [#allocation4]
    $region25: #{tpu_custom_call.1} parent=1 // pred_fallthru
      _
    // Predicated region
    $region26: #{tpu_custom_call.1} parent=1 // pred_check
      _
    $region27: #{tpu_custom_call.1} parent=1 // pred_check_branch
      %93 = sbr.rel (0) target = $region29
    $region28: #{tpu_custom_call.1} parent=1 // pred_region
      %95 = dma.done [#allocation4], 128
    $region29: #{tpu_custom_call.1} parent=1 // pred_fallthru
      _
    %96 = vsyncpa [#allocation3], 1
    %97 = vsyncpa [#allocation6], 1
    %98 = vsyncpa [#allocation4], 1

</llo_original>
